<compile_context>
chip_gen: v7x
topology: tpu7x:2x2x1
jax: 0.10.0
libtpu: 0.0.40
codegen_flags: <defaults>
</compile_context>

<pallas_src>
import functools

import jax
import jax.numpy as jnp
from jax import lax
from jax.experimental import pallas as pl
from jax.experimental.pallas import tpu as pltpu


# ---------------------------------------------------------------------------
# Hardware-aware budgets
# ---------------------------------------------------------------------------
def _vmem_budgets():
    """Per-block VMEM budget + scoped-VMEM limit, derived from the chip's VMEM."""
    try:
        vmem = int(pltpu.get_tpu_info().vmem_capacity_bytes)
    except Exception:
        vmem = 64 * 1024 * 1024                     # conservative (v7x per-core)
    vmem_limit = min((vmem * 3) // 4, 100 * 1024 * 1024)
    # Pass-2 working set ~ 4x block (in + out, double-buffered) + upcast temps.
    block_budget = max(min(vmem // 16, 8 * 1024 * 1024), 2 * 1024 * 1024)
    return block_budget, vmem_limit


def _choose_tiles(num_rows, hw, itemsize, block_budget):
    """Pick (row_tile, hw_tile) respecting the (8,128)/full-extent rule and budget."""
    # Row tile: full extent when small (always layout-legal), else 256
    # (a multiple of both 8 and 16, so f32 and bf16 sublane packing are both fine).
    row_tile = num_rows if num_rows <= 256 else 256
    # Lane tile: largest multiple of 128 that fits the per-block budget; use the
    # full (possibly non-128-divisible) extent when the whole row fits.
    max_lanes = max(block_budget // (row_tile * itemsize), 128)
    if hw <= max_lanes:
        hw_tile = hw
    else:
        hw_padded = ((hw + 127) // 128) * 128
        hw_tile = min((max_lanes // 128) * 128, hw_padded)
    return row_tile, hw_tile


# ---------------------------------------------------------------------------
# Kernels
# ---------------------------------------------------------------------------
def _stats_kernel(x_ref, sum_ref, sq_ref, *, hw, hw_tile):
    """Accumulate per-row sum / sum-of-squares over the hw (innermost) grid axis."""
    s = pl.program_id(2)

    @pl.when(s == 0)
    def _():
        sum_ref[...] = jnp.zeros_like(sum_ref)
        sq_ref[...] = jnp.zeros_like(sq_ref)

    x = x_ref[...].astype(jnp.float32)                         # (TR, T)
    if hw % hw_tile != 0:
        # Padded last hw tile: zero out-of-range lanes before reducing.
        blk = pl.program_id(0) * pl.num_programs(2) + s
        lane = lax.broadcasted_iota(jnp.int32, x.shape, dimension=1)
        x = jnp.where(blk * hw_tile + lane < hw, x, 0.0)

    sum_ref[...] += jnp.sum(x, axis=-1, keepdims=True)[None]   # (1, TR, 1)
    sq_ref[...] += jnp.sum(x * x, axis=-1, keepdims=True)[None]


def _normalize_kernel(x_ref, a_ref, b_ref, out_ref):
    """out = x * a + b; f32 coefficients broadcast along lanes."""
    x = x_ref[...].astype(jnp.float32)
    out_ref[...] = (x * a_ref[...] + b_ref[...]).astype(out_ref.dtype)


def _fused_kernel(x_ref, w_ref, b_ref, out_ref, *, eps, inv_n):
    """Single-block fused batch norm for VMEM-resident tensors."""
    x = x_ref[...].astype(jnp.float32)                         # (B, C, HW)
    s1 = jnp.sum(jnp.sum(x, axis=2, keepdims=True), axis=0, keepdims=True)
    s2 = jnp.sum(jnp.sum(x * x, axis=2, keepdims=True), axis=0, keepdims=True)
    mean = s1 * inv_n                                          # (1, C, 1)
    var = jnp.maximum(s2 * inv_n - mean * mean, 0.0)           # biased variance
    a = w_ref[...].reshape(1, -1, 1) * lax.rsqrt(var + eps)
    b = b_ref[...].reshape(1, -1, 1) - mean * a
    out_ref[...] = (x * a + b).astype(out_ref.dtype)


# ---------------------------------------------------------------------------
# Wrappers
# ---------------------------------------------------------------------------
def _fused_forward(x, weight, bias, eps, vmem_limit):
    B, C, H, W = x.shape
    HW = H * W
    x3 = x.reshape(B, C, HW)
    w2 = weight.reshape(C, 1).astype(jnp.float32)
    b2 = bias.reshape(C, 1).astype(jnp.float32)
    kernel = functools.partial(_fused_kernel, eps=float(eps),
                               inv_n=1.0 / float(B * HW))
    out3 = pl.pallas_call(
        kernel,
        out_shape=jax.ShapeDtypeStruct((B, C, HW), x.dtype),
        grid_spec=pltpu.PrefetchScalarGridSpec(
            num_scalar_prefetch=0,
            grid=(1,),
            in_specs=[
                pl.BlockSpec((B, C, HW), lambda i: (0, 0, 0)),
                pl.BlockSpec((C, 1), lambda i: (0, 0)),
                pl.BlockSpec((C, 1), lambda i: (0, 0)),
            ],
            out_specs=pl.BlockSpec((B, C, HW), lambda i: (0, 0, 0)),
        ),
        compiler_params=pltpu.CompilerParams(
            dimension_semantics=("arbitrary",),
            vmem_limit_bytes=int(vmem_limit),
        ),
    )(x3, w2, b2)
    return out3.reshape(B, C, H, W)


def _two_pass_forward(x, weight, bias, eps, block_budget, vmem_limit):
    B, C, H, W = x.shape
    R, HW = B * C, H * W
    n_per_channel = B * H * W

    x2 = x.reshape(R, HW)                                      # free view of NCHW
    TR, T = _choose_tiles(R, HW, jnp.dtype(x.dtype).itemsize, block_budget)
    n_r = (R + TR - 1) // TR
    n_s = (HW + T - 1) // T

    # With a single row tile, split the hw reduction across a leading "parallel"
    # axis so both v7x TensorCores get work (harmless on 1-TC v5e/v6e).
    n_split = 2 if (n_r == 1 and n_s >= 2 and n_s % 2 == 0) else 1
    n_sp = n_s // n_split

    # ---- pass 1: per-row sum / sum-of-squares (tiled, pipelined reduction) ----
    stats_kernel = functools.partial(_stats_kernel, hw=HW, hw_tile=T)
    rowsum, rowsq = pl.pallas_call(
        stats_kernel,
        out_shape=(
            jax.ShapeDtypeStruct((n_split, R, 1), jnp.float32),
            jax.ShapeDtypeStruct((n_split, R, 1), jnp.float32),
        ),
        grid_spec=pltpu.PrefetchScalarGridSpec(
            num_scalar_prefetch=0,
            grid=(n_split, n_r, n_sp),
            in_specs=[pl.BlockSpec((TR, T), lambda p, r, s: (r, p * n_sp + s))],
            out_specs=(
                pl.BlockSpec((1, TR, 1), lambda p, r, s: (p, r, 0)),  # resident acc
                pl.BlockSpec((1, TR, 1), lambda p, r, s: (p, r, 0)),
            ),
        ),
        compiler_params=pltpu.CompilerParams(
            dimension_semantics=("parallel", "parallel", "arbitrary"),
            vmem_limit_bytes=int(vmem_limit),
        ),
    )(x2)

    # ---- tiny per-channel affine coefficients (C-sized, plain JAX, f32) ----
    ch_sum = rowsum.sum(axis=0)[:, 0].reshape(B, C).sum(axis=0)
    ch_sq = rowsq.sum(axis=0)[:, 0].reshape(B, C).sum(axis=0)
    mean = ch_sum / n_per_channel
    var = jnp.maximum(ch_sq / n_per_channel - mean * mean, 0.0)  # biased variance
    a = weight.astype(jnp.float32) * lax.rsqrt(var + eps)
    b_aff = bias.astype(jnp.float32) - mean * a
    a_row = jnp.tile(a, B).reshape(R, 1)                         # row r -> channel r % C
    b_row = jnp.tile(b_aff, B).reshape(R, 1)

    # ---- pass 2: normalize + affine as a single per-element FMA ----
    out2 = pl.pallas_call(
        _normalize_kernel,
        out_shape=jax.ShapeDtypeStruct((R, HW), x.dtype),
        grid_spec=pltpu.PrefetchScalarGridSpec(
            num_scalar_prefetch=0,
            grid=(n_r, n_s),
            in_specs=[
                pl.BlockSpec((TR, T), lambda r, s: (r, s)),
                pl.BlockSpec((TR, 1), lambda r, s: (r, 0)),
                pl.BlockSpec((TR, 1), lambda r, s: (r, 0)),
            ],
            out_specs=pl.BlockSpec((TR, T), lambda r, s: (r, s)),
        ),
        compiler_params=pltpu.CompilerParams(
            dimension_semantics=("parallel", "parallel"),
            vmem_limit_bytes=int(vmem_limit),
        ),
    )(x2, a_row, b_row)

    return out2.reshape(B, C, H, W)


def bfp_batchnorm2d(x, weight, bias, eps=1e-5, *, force_path=None,
                    max_block_bytes=None):
    """Forward of BFPBatchNorm2d_custom. x: (B,C,H,W); weight/bias: (C,)."""
    B, C, H, W = x.shape
    block_budget, vmem_limit = _vmem_budgets()
    if max_block_bytes is not None:
        block_budget = int(max_block_bytes)

    resident_bytes = B * C * H * W * 4            # f32 working copy inside kernel
    use_fused = force_path == "fused" or (
        force_path is None and resident_bytes <= vmem_limit // 12)
    if use_fused:
        return _fused_forward(x, weight, bias, eps, vmem_limit)
    return _two_pass_forward(x, weight, bias, eps, block_budget, vmem_limit)


def reference_bn(x, weight, bias, eps=1e-5):
    mean = jnp.mean(x, axis=(0, 2, 3), keepdims=True)
    var = jnp.mean((x - mean) ** 2, axis=(0, 2, 3), keepdims=True)
    g = weight.reshape(1, -1, 1, 1)
    b = bias.reshape(1, -1, 1, 1)
    return (x - mean) / jnp.sqrt(var + eps) * g + b


if __name__ == "__main__":
    key = jax.random.PRNGKey(0)
    kx, kw, kx2 = jax.random.split(key, 3)

    eps = 1e-5

    # Module __init__/reset_parameters: weight ~ U[0,1), bias = 0, eps = 1e-5.
    B, C, H, W = 2, 4, 16, 16
    x = jax.random.normal(kx, (B, C, H, W), dtype=jnp.float32)
    weight = jax.random.uniform(kw, (C,), dtype=jnp.float32)
    bias = jnp.zeros((C,), dtype=jnp.float32)
    ref = reference_bn(x, weight, bias, eps)

    # 1) auto dispatch: VMEM-resident -> fused single-kernel path.
    out = jax.block_until_ready(bfp_batchnorm2d(x, weight, bias, eps))
    assert out.shape == (B, C, H, W)
    assert jnp.allclose(out, ref, atol=2e-5, rtol=2e-5), "fused path mismatch"

    # 2) two-pass path with default (large-block) tiling.
    out2 = jax.block_until_ready(
        bfp_batchnorm2d(x, weight, bias, eps, force_path="two_pass"))
    assert jnp.allclose(out2, ref, atol=2e-5, rtol=2e-5), "two-pass mismatch"

    # 3) two-pass path with tiny blocks -> exercises the 2-way hw split (n_r == 1).
    out3 = jax.block_until_ready(
        bfp_batchnorm2d(x, weight, bias, eps, force_path="two_pass",
                        max_block_bytes=8 * 128 * 4))
    assert jnp.allclose(out3, ref, atol=2e-5, rtol=2e-5), "split-hw mismatch"

    # 4) non-128-divisible H*W -> exercises padded hw tiling + lane masking.
    Hb, Wb = 24, 24
    xb = jax.random.normal(kx2, (B, C, Hb, Wb), dtype=jnp.float32)
    refb = reference_bn(xb, weight, bias, eps)
    outb = jax.block_until_ready(
        bfp_batchnorm2d(xb, weight, bias, eps, force_path="two_pass",
                        max_block_bytes=8 * 128 * 4))
    assert jnp.allclose(outb, refb, atol=2e-5, rtol=2e-5), "padded-hw mismatch"

    print("KERNEL_OK")
</pallas_src>

<mosaic_0001>
module attributes {stable_mosaic.version = 11 : i64} {
  func.func @_fused_kernel(%arg0: i32, %arg1: memref<2x4x256xf32, #tpu.memory_space<vmem>>, %arg2: memref<4x1xf32, #tpu.memory_space<vmem>>, %arg3: memref<4x1xf32, #tpu.memory_space<vmem>>, %arg4: memref<2x4x256xf32, #tpu.memory_space<vmem>>) attributes {dimension_semantics = [#tpu.dimension_semantics<arbitrary>], iteration_bounds = array<i64: 1>, scalar_prefetch = 0 : i64, scratch_operands = 0 : i64, tpu.core_type = #tpu.core_type<tc>, window_params = [{pipeline_mode = #tpu.pipeline_mode<synchronous>, transform_indices = @transform_0, window_bounds = array<i64: 2, 4, 256>}, {pipeline_mode = #tpu.pipeline_mode<synchronous>, transform_indices = @transform_1, window_bounds = array<i64: 4, 1>}, {pipeline_mode = #tpu.pipeline_mode<synchronous>, transform_indices = @transform_2, window_bounds = array<i64: 4, 1>}, {pipeline_mode = #tpu.pipeline_mode<synchronous>, transform_indices = @transform_3, window_bounds = array<i64: 2, 4, 256>}]} {
    %c0 = arith.constant 0 : index
    %c0_0 = arith.constant 0 : index
    %c0_1 = arith.constant 0 : index
    %0 = vector.load %arg1[%c0, %c0_0, %c0_1] : memref<2x4x256xf32, #tpu.memory_space<vmem>>, vector<2x4x256xf32>
    %cst = arith.constant dense<0.000000e+00> : vector<2x4xf32>
    %1 = vector.multi_reduction <add>, %0, %cst [2] : vector<2x4x256xf32> to vector<2x4xf32>
    %2 = vector.shape_cast %1 : vector<2x4xf32> to vector<2x4x1xf32>
    %cst_2 = arith.constant dense<0.000000e+00> : vector<4x1xf32>
    %3 = vector.multi_reduction <add>, %2, %cst_2 [0] : vector<2x4x1xf32> to vector<4x1xf32>
    %4 = vector.shape_cast %3 : vector<4x1xf32> to vector<1x4x1xf32>
    %5 = arith.mulf %0, %0 : vector<2x4x256xf32>
    %cst_3 = arith.constant dense<0.000000e+00> : vector<2x4xf32>
    %6 = vector.multi_reduction <add>, %5, %cst_3 [2] : vector<2x4x256xf32> to vector<2x4xf32>
    %7 = vector.shape_cast %6 : vector<2x4xf32> to vector<2x4x1xf32>
    %cst_4 = arith.constant dense<0.000000e+00> : vector<4x1xf32>
    %8 = vector.multi_reduction <add>, %7, %cst_4 [0] : vector<2x4x1xf32> to vector<4x1xf32>
    %9 = vector.shape_cast %8 : vector<4x1xf32> to vector<1x4x1xf32>
    %cst_5 = arith.constant 0.001953125 : f32
    %10 = vector.broadcast %cst_5 : f32 to vector<1x4x1xf32>
    %11 = arith.mulf %4, %10 : vector<1x4x1xf32>
    %cst_6 = arith.constant 0.001953125 : f32
    %12 = vector.broadcast %cst_6 : f32 to vector<1x4x1xf32>
    %13 = arith.mulf %9, %12 : vector<1x4x1xf32>
    %14 = arith.mulf %11, %11 : vector<1x4x1xf32>
    %15 = arith.subf %13, %14 : vector<1x4x1xf32>
    %cst_7 = arith.constant 0.000000e+00 : f32
    %16 = vector.broadcast %cst_7 : f32 to vector<1x4x1xf32>
    %17 = arith.maximumf %15, %16 : vector<1x4x1xf32>
    %c0_8 = arith.constant 0 : index
    %c0_9 = arith.constant 0 : index
    %18 = vector.load %arg2[%c0_8, %c0_9] : memref<4x1xf32, #tpu.memory_space<vmem>>, vector<4x1xf32>
    %19 = vector.shape_cast %18 : vector<4x1xf32> to vector<1x4x1xf32>
    %cst_10 = arith.constant 9.99999974E-6 : f32
    %20 = vector.broadcast %cst_10 : f32 to vector<1x4x1xf32>
    %21 = arith.addf %17, %20 : vector<1x4x1xf32>
    %22 = math.rsqrt %21 : vector<1x4x1xf32>
    %23 = arith.mulf %19, %22 : vector<1x4x1xf32>
    %c0_11 = arith.constant 0 : index
    %c0_12 = arith.constant 0 : index
    %24 = vector.load %arg3[%c0_11, %c0_12] : memref<4x1xf32, #tpu.memory_space<vmem>>, vector<4x1xf32>
    %25 = vector.shape_cast %24 : vector<4x1xf32> to vector<1x4x1xf32>
    %26 = arith.mulf %11, %23 : vector<1x4x1xf32>
    %27 = arith.subf %25, %26 : vector<1x4x1xf32>
    %28 = vector.broadcast %23 : vector<1x4x1xf32> to vector<2x4x256xf32>
    %29 = arith.mulf %0, %28 : vector<2x4x256xf32>
    %30 = vector.broadcast %27 : vector<1x4x1xf32> to vector<2x4x256xf32>
    %31 = arith.addf %29, %30 : vector<2x4x256xf32>
    %c0_13 = arith.constant 0 : index
    %c0_14 = arith.constant 0 : index
    %c0_15 = arith.constant 0 : index
    %32 = vector.load %arg4[%c0_13, %c0_14, %c0_15] : memref<2x4x256xf32, #tpu.memory_space<vmem>>, vector<2x4x256xf32>
    tpu.vector_store %arg4[%c0_13, %c0_14, %c0_15], %31 {strides = array<i32>} : memref<2x4x256xf32, #tpu.memory_space<vmem>>, vector<2x4x256xf32>,
    return
  }
  func.func @transform_0(%arg0: i32) -> (i32, i32, i32) {
    %c0_i32 = arith.constant 0 : i32
    %c0_i32_0 = arith.constant 0 : i32
    %c0_i32_1 = arith.constant 0 : i32
    %c0_i32_2 = arith.constant 0 : i32
    return %c0_i32, %c0_i32_0, %c0_i32_1 : i32, i32, i32
  }
  func.func @transform_1(%arg0: i32) -> (i32, i32) {
    %c0_i32 = arith.constant 0 : i32
    %c0_i32_0 = arith.constant 0 : i32
    %c0_i32_1 = arith.constant 0 : i32
    return %c0_i32, %c0_i32_0 : i32, i32
  }
  func.func @transform_2(%arg0: i32) -> (i32, i32) {
    %c0_i32 = arith.constant 0 : i32
    %c0_i32_0 = arith.constant 0 : i32
    %c0_i32_1 = arith.constant 0 : i32
    return %c0_i32, %c0_i32_0 : i32, i32
  }
  func.func @transform_3(%arg0: i32) -> (i32, i32, i32) {
    %c0_i32 = arith.constant 0 : i32
    %c0_i32_0 = arith.constant 0 : i32
    %c0_i32_1 = arith.constant 0 : i32
    %c0_i32_2 = arith.constant 0 : i32
    return %c0_i32, %c0_i32_0, %c0_i32_1 : i32, i32, i32
  }
}

</mosaic_0001>

<llo_original>
// kernel: tpu_custom_call.1
$region0: #{tpu_custom_call.1}
  #allocation0 [shape = 'u32[]', space=smem, size = 0x4, offset = 0x4, fixed_abs, tag = 'smem constant byte address 0x4 - core index']
  #allocation1 [shape = 'u32[144,128]{1,0:T(1,128)}', space=vmem, size = 0x12000, scoped, tag = 'internal scratch']
  %s0 = inlined_call_operand.hbm [shape: f32[2,4,256], index: 0, kind: input, shape index: {}]
  %s1 = inlined_call_operand.vmem [shape: f32[4,1], index: 1, kind: input, shape index: {}]
  %s2 = inlined_call_operand.vmem [shape: f32[4,1], index: 2, kind: input, shape index: {}]
  %s3 = inlined_call_operand.hbm [shape: f32[2,4,256], index: 3, kind: output, shape index: {}]
  %s4 = sld [smem:[#allocation0]]
  $region26: #{tpu_custom_call.1} parent=0
    _
  %s6 = ssub.s32 1, %s4
  %s7 = scalar_select 0, %s6, %s4
  $region1: #{tpu_custom_call.1} parent=0
    #allocation2 [shape = 'u8[8192]{0}', space=vmem, size = 0x2000, scoped, tag = 'input window, operand 0, single buffered']
    #allocation3 [shape = 's32[1]{0}', space=sflag, size = 0x4, scoped, tag = 'scoped memory for tpu_custom_call.1']
    #allocation4 [shape = 's32[1]{0}', space=sflag, size = 0x4, scoped, tag = 'scoped memory for tpu_custom_call.1']
    #allocation5 [shape = 'u8[8192]{0}', space=vmem, size = 0x2000, scoped, tag = 'output window, operand 0, single buffered']
    %8 = vsyncpa [#allocation3], 0
    %9 = vsyncpa [#allocation4], 0
    // Predicated region
    $region2: #{tpu_custom_call.1} parent=1 // pred_check
      _
    $region3: #{tpu_custom_call.1} parent=1 // pred_check_branch
      %11 = sbr.rel (0) target = $region5
    $region4: #{tpu_custom_call.1} parent=1 // pred_region
      %s13 = ssub.s32 256, 256
      %14 = vsyncadd [#allocation3], %s13
      %s15 = sshll.u32 [#allocation2], 4
      %s16 = int_to_ptr.vmem [resolvable:$true] %s15
      %21 = dma.hbm_to_vmem [thread:$0]  %s0, 256, %s16, [#allocation3], 128, 128, 8
    $region5: #{tpu_custom_call.1} parent=1 // pred_fallthru
      _
    // Predicated region
    $region6: #{tpu_custom_call.1} parent=1 // pred_check
      _
    $region7: #{tpu_custom_call.1} parent=1 // pred_check_branch
      %23 = sbr.rel (0) target = $region9
    $region8: #{tpu_custom_call.1} parent=1 // pred_region
      _
    $region9: #{tpu_custom_call.1} parent=1 // pred_fallthru
      _
    // Predicated region
    $region10: #{tpu_custom_call.1} parent=1 // pred_check
      _
    $region11: #{tpu_custom_call.1} parent=1 // pred_check_branch
      %25 = sbr.rel (0) target = $region13
    $region12: #{tpu_custom_call.1} parent=1 // pred_region
      _
    $region13: #{tpu_custom_call.1} parent=1 // pred_fallthru
      _
    // Predicated region
    $region14: #{tpu_custom_call.1} parent=1 // pred_check
      _
    $region15: #{tpu_custom_call.1} parent=1 // pred_check_branch
      %27 = sbr.rel (0) target = $region17
    $region16: #{tpu_custom_call.1} parent=1 // pred_region
      %28 = dma.done [#allocation3], 256
    $region17: #{tpu_custom_call.1} parent=1 // pred_fallthru
      _
    %v29 = vld [vmem:[#allocation2] sm:$0xff]
    %v30 = vld [vmem:[#allocation2 + $0x8] sm:$0xff]
    %v33 = vcombine.high %v29, %v29
    %v34 = vcombine.high %v30, %v30
    %vm37 = vcmask 1043456
    %v38 = vsel %vm37, %v29, 0.0
    %v39 = vsel %vm37, %v33, 0.0
    %v40 = vadd.f32 %v38, %v39
    %41 = vadd.xlane.f32.xlu0 %v40
    %v42 = vpop.xlane.xlu0 %41
    %v43 = vsel %vm37, %v30, 0.0
    %v44 = vsel %vm37, %v34, 0.0
    %v45 = vadd.f32 %v43, %v44
    %46 = vadd.xlane.f32.xlu0 %v45
    %v47 = vpop.xlane.xlu0 %46
    %v48 = vsel %vm37, %v42, 0.0
    %v49 = vsel %vm37, %v47, 0.0
    %v50 = vadd.f32 %v48, %v49
    %v51 = vmul.f32 %v29, %v29
    %v52 = vmul.f32 %v30, %v30
    %v55 = vcombine.high %v51, %v51
    %v56 = vcombine.high %v52, %v52
    %v59 = vsel %vm37, %v51, 0.0
    %v60 = vsel %vm37, %v55, 0.0
    %v61 = vadd.f32 %v59, %v60
    %62 = vadd.xlane.f32.xlu0 %v61
    %v63 = vpop.xlane.xlu0 %62
    %v64 = vsel %vm37, %v52, 0.0
    %v65 = vsel %vm37, %v56, 0.0
    %v66 = vadd.f32 %v64, %v65
    %67 = vadd.xlane.f32.xlu0 %v66
    %v68 = vpop.xlane.xlu0 %67
    %v69 = vsel %vm37, %v63, 0.0
    %v70 = vsel %vm37, %v68, 0.0
    %v71 = vadd.f32 %v69, %v70
    %v72 = vmul.f32 %v50, 0.001953125
    %v73 = vmul.f32 %v71, 0.001953125
    %v74 = vmul.f32 %v72, %v72
    %v75 = vsub.f32 %v73, %v74
    %v76 = vmax.f32 %v75, 0.0
    %v77 = vld [vmem:[%s1] sm:$0xf]
    %v78 = vadd.f32 %v76, 1e-05
    %v79 = vrsqrt.pop %v78
    %v80 = vmul.f32 %v77, %v79
    %v81 = vld [vmem:[%s2] sm:$0xf]
    %v82 = vmul.f32 %v72, %v80
    %v83 = vsub.f32 %v81, %v82
    %85 = vset.pattern.permute.xlu0 0
    %86 = vperm.xlu0 %85, %v80
    %v87 = vpop.permute.xlu0 %86
    %v89 = vunpack.c.l.s4 839922192
    %v90 = vunpack.c.0.s8 %v89
    %v91 = vlaneseq
    %v92 = vshrl.u32 %v91, 7
    %v93 = vsub.s32 %v90, %v92
    %v94 = vrot.slane %v87, %v93
    %v96 = vmul.f32 %v29, %v94
    %v97 = vmul.f32 %v30, %v94
    %99 = vset.pattern.permute.xlu0 0
    %100 = vperm.xlu0 %99, %v83
    %v101 = vpop.permute.xlu0 %100
    %v103 = vunpack.c.l.s4 839922192
    %v104 = vunpack.c.0.s8 %v103
    %v105 = vlaneseq
    %v106 = vshrl.u32 %v105, 7
    %v107 = vsub.s32 %v104, %v106
    %v108 = vrot.slane %v101, %v107
    %v110 = vadd.f32 %v96, %v108
    %v111 = vadd.f32 %v97, %v108
    %112 = vst [vmem:[#allocation5] sm:$0xff] %v110
    %113 = vst [vmem:[#allocation5 + $0x8] sm:$0xff] %v111
    // Predicated region
    $region18: #{tpu_custom_call.1} parent=1 // pred_check
      _
    $region19: #{tpu_custom_call.1} parent=1 // pred_check_branch
      %115 = sbr.rel (0) target = $region21
    $region20: #{tpu_custom_call.1} parent=1 // pred_region
      %s117 = ssub.s32 256, 256
      %118 = vsyncadd [#allocation4], %s117
      %s119 = sshll.u32 [#allocation5], 4
      %s120 = int_to_ptr.vmem [resolvable:$true] %s119
      %125 = dma.vmem_to_hbm [thread:$0]  %s120, 256, %s3, [#allocation4], 128, 128, 8
    $region21: #{tpu_custom_call.1} parent=1 // pred_fallthru
      _
    // Predicated region
    $region22: #{tpu_custom_call.1} parent=1 // pred_check
      _
    $region23: #{tpu_custom_call.1} parent=1 // pred_check_branch
      %127 = sbr.rel (0) target = $region25
    $region24: #{tpu_custom_call.1} parent=1 // pred_region
      %128 = dma.done [#allocation4], 256
    $region25: #{tpu_custom_call.1} parent=1 // pred_fallthru
      _
    %129 = vsyncpa [#allocation3], 1
    %130 = vsyncpa [#allocation4], 1

</llo_original>
